<compile_context>
chip_gen: v7x
topology: tpu7x:2x2x1
jax: 0.10.0
libtpu: 0.0.40
codegen_flags: <defaults>
</compile_context>

<pallas_src>
import functools
import math

import jax
import jax.numpy as jnp
from jax.experimental import pallas as pl
from jax.experimental.pallas import tpu as pltpu

_LANE = 128                      # f32 lane width
_SUBLANE = 8                     # f32 sublane width
_MAX_TILE_B = 4096               # absolute batch-tile cap
_VMEM_TILE_BUDGET = 8 * 1024 * 1024  # bytes for double-buffered per-step x/out tiles
_XLA_FALLBACK_ROWS = 64          # below this, plain XLA is faster than a kernel launch


def _round_up(n, m):
    return ((n + m - 1) // m) * m


def _fused_linear_kernel(x_ref, w_ref, b_ref, o_ref):
    # One unmasked MXU matmul on the 128-lane-padded weight; only num_classes
    # columns are stored back to HBM (lane-masked store, but 8x less write traffic).
    out_width = o_ref.shape[-1]
    acc = jnp.dot(x_ref[...], w_ref[...], preferred_element_type=jnp.float32)
    o_ref[...] = (acc[:, :out_width] + b_ref[...]).astype(o_ref.dtype)


def fuse_and_pad_params(params):
    """Collapse the three Linear layers (no activations) into a single affine map.

    The fusion runs at Precision.HIGHEST (one-time parameter prep) so W_eff/b_eff do
    not inherit reduced-precision matmul error. Only the weight's output dim is
    zero-padded to a multiple of 128 lanes (for an unmasked MXU); the bias stays at
    its true width since it is added after the in-kernel slice.

    params: (w1, b1, w2, b2, w3, b3) with w_i shaped (in, out), b_i shaped (1, out).
    Returns (w_eff_padded, b_eff, num_classes)."""
    w1, b1, w2, b2, w3, b3 = params
    num_classes = w3.shape[1]
    hi = jax.lax.Precision.HIGHEST
    w_eff = jnp.dot(jnp.dot(w1, w2, precision=hi), w3, precision=hi)          # (F, C)
    b_eff = (jnp.dot(jnp.dot(b1, w2, precision=hi), w3, precision=hi)
             + jnp.dot(b2, w3, precision=hi) + b3)                            # (1, C)
    c_pad = _round_up(num_classes, _LANE)
    w_eff = jnp.pad(w_eff, ((0, 0), (0, c_pad - num_classes)))
    return w_eff, b_eff, num_classes


def _pick_tile_b(B, F, out_width):
    """Batch tile: multiple of 8, sized so the double-buffered x + out tiles fit a
    comfortable VMEM budget (well under the 16/32/32 MiB scoped defaults on
    v5e/v6e/v7x), capped at _MAX_TILE_B, and additionally capped at ceil(B/2) so a
    v7x chip's two TensorCores both get grid steps."""
    per_row_bytes = 2 * (F + out_width) * 4          # double-buffered x + out rows, f32
    cap = (_VMEM_TILE_BUDGET // per_row_bytes) // _SUBLANE * _SUBLANE
    cap = max(_SUBLANE, min(cap, _MAX_TILE_B))
    half = _round_up((B + 1) // 2, _SUBLANE)         # >=2 grid steps when B allows
    return max(_SUBLANE, min(cap, half))


@functools.partial(jax.jit, static_argnames=("num_classes",))
def _pallas_forward(x, w_eff, b_eff, num_classes):
    """x: (B, F) f32.  w_eff: (F, C_pad) f32 (lane-padded), b_eff: (1, num_classes).
    Returns (B, num_classes) f32."""
    B, F = x.shape
    c_pad = w_eff.shape[1]

    tile_b = _pick_tile_b(B, F, num_classes)
    grid = (pl.cdiv(B, tile_b),)                     # ragged last block handled by Pallas

    flops = 2 * B * F * c_pad                        # MXU runs the padded width
    bytes_accessed = 4 * (B * F + F * c_pad + num_classes + B * num_classes)

    return pl.pallas_call(
        _fused_linear_kernel,
        out_shape=jax.ShapeDtypeStruct((B, num_classes), jnp.float32),
        grid=grid,
        in_specs=[
            pl.BlockSpec((tile_b, F), lambda i: (i, 0)),         # x tile, pipelined
            pl.BlockSpec((F, c_pad), lambda i: (0, 0)),          # fused weight, resident
            pl.BlockSpec((1, num_classes), lambda i: (0, 0)),    # fused bias,  resident
        ],
        out_specs=pl.BlockSpec((tile_b, num_classes), lambda i: (i, 0)),
        compiler_params=pltpu.CompilerParams(
            dimension_semantics=("parallel",),                   # megacore split on v7x
        ),
        cost_estimate=pl.CostEstimate(
            flops=flops, transcendentals=0, bytes_accessed=bytes_accessed
        ),
    )(x, w_eff, b_eff)


@functools.partial(jax.jit, static_argnames=("num_classes",))
def _xla_forward(x, w_eff, b_eff, num_classes):
    # Tiny-batch fast path: the whole problem is smaller than pallas_call's fixed cost.
    return jnp.dot(x, w_eff[:, :num_classes],
                   preferred_element_type=jnp.float32) + b_eff


def swapping_detection_forward(x, w_eff, b_eff, num_classes):
    """Full forward of SwappingDetectionModel on pre-fused params."""
    if x.shape[0] < _XLA_FALLBACK_ROWS:
        return _xla_forward(x, w_eff, b_eff, num_classes)
    return _pallas_forward(x, w_eff, b_eff, num_classes)


def init_params(key, num_features, num_classes):
    """Deterministic init mimicking torch.nn.Linear default:
    U(-1/sqrt(fan_in), 1/sqrt(fan_in)) for weight and bias.
    Weights are produced directly in (in, out) layout."""
    dims = [(num_features, 101), (101, 102), (102, num_classes)]
    params = []
    for fan_in, fan_out in dims:
        key, kw, kb = jax.random.split(key, 3)
        bound = 1.0 / math.sqrt(fan_in)
        w = jax.random.uniform(kw, (fan_in, fan_out), jnp.float32, -bound, bound)
        b = jax.random.uniform(kb, (1, fan_out), jnp.float32, -bound, bound)
        params += [w, b]
    return tuple(params)


def reference_forward(x, params):
    """Layer-by-layer reference (matches the PyTorch module's forward exactly)."""
    w1, b1, w2, b2, w3, b3 = params
    hi = jax.lax.Precision.HIGHEST
    h = jnp.dot(x, w1, precision=hi) + b1
    h = jnp.dot(h, w2, precision=hi) + b2
    return jnp.dot(h, w3, precision=hi) + b3


if __name__ == "__main__":
    batch = 250          # not a multiple of the tile -> exercises the ragged last block
    num_features = 32
    num_classes = 16

    key = jax.random.PRNGKey(0)
    key, kx = jax.random.split(key)
    x = jax.random.normal(kx, (batch, num_features), jnp.float32)
    params = init_params(key, num_features, num_classes)

    # One-time param preparation (high-precision fusion + lane padding of the weight).
    w_eff, b_eff, n_cls = fuse_and_pad_params(params)

    # Pallas path (batch >= fallback threshold): 2 grid steps, ragged last tile.
    out = swapping_detection_forward(x, w_eff, b_eff, n_cls)
    out = jax.block_until_ready(out)
    ref = reference_forward(x, params)
    assert out.shape == (batch, num_classes)
    # Fusing the layers reorders f32 rounding slightly; differences stay well below this.
    assert jnp.allclose(out, ref, atol=5e-3, rtol=5e-3), "mismatch vs reference (pallas)"

    # Tiny-batch fast path (plain XLA) sanity check.
    x_small = x[:8]
    out_small = jax.block_until_ready(
        swapping_detection_forward(x_small, w_eff, b_eff, n_cls))
    assert jnp.allclose(out_small, reference_forward(x_small, params),
                        atol=5e-3, rtol=5e-3), "mismatch vs reference (xla fallback)"

    print("KERNEL_OK")
</pallas_src>

<mosaic_0001>
module attributes {stable_mosaic.version = 11 : i64} {
  func.func @_fused_linear_kernel(%arg0: i32, %arg1: memref<128x32xf32, #tpu.memory_space<vmem>>, %arg2: memref<32x128xf32, #tpu.memory_space<vmem>>, %arg3: memref<1x16xf32, #tpu.memory_space<vmem>>, %arg4: memref<128x16xf32, #tpu.memory_space<vmem>>) attributes {dimension_semantics = [#tpu.dimension_semantics<parallel>], iteration_bounds = array<i64: 2>, scalar_prefetch = 0 : i64, scratch_operands = 0 : i64, tpu.core_type = #tpu.core_type<tc>, window_params = [{transform_indices = @transform_0, window_bounds = array<i64: 128, 32>}, {pipeline_mode = #tpu.pipeline_mode<synchronous>, transform_indices = @transform_1, window_bounds = array<i64: 32, 128>}, {pipeline_mode = #tpu.pipeline_mode<synchronous>, transform_indices = @transform_2, window_bounds = array<i64: 1, 16>}, {transform_indices = @transform_3, window_bounds = array<i64: 128, 16>}]} {
    %c0 = arith.constant 0 : index
    %c0_0 = arith.constant 0 : index
    %0 = vector.load %arg1[%c0, %c0_0] : memref<128x32xf32, #tpu.memory_space<vmem>>, vector<128x32xf32>
    %c0_1 = arith.constant 0 : index
    %c0_2 = arith.constant 0 : index
    %1 = vector.load %arg2[%c0_1, %c0_2] : memref<32x128xf32, #tpu.memory_space<vmem>>, vector<32x128xf32>
    %cst = arith.constant dense<0.000000e+00> : vector<128x128xf32>
    %2 = tpu.matmul %0, %1, %cst {dimension_numbers = #tpu.dot_dimension_numbers<[1], [0], [0], [1], [0, 0, 1, 1], [], []>} : vector<128x32xf32>, vector<32x128xf32>, vector<128x128xf32> -> vector<128x128xf32>
    %3 = vector.extract_strided_slice %2 {offsets = [0, 0], sizes = [128, 16], strides = [1, 1]} : vector<128x128xf32> to vector<128x16xf32>
    %c0_3 = arith.constant 0 : index
    %c0_4 = arith.constant 0 : index
    %4 = vector.load %arg3[%c0_3, %c0_4] : memref<1x16xf32, #tpu.memory_space<vmem>>, vector<1x16xf32>
    %5 = vector.broadcast %4 : vector<1x16xf32> to vector<128x16xf32>
    %6 = arith.addf %3, %5 : vector<128x16xf32>
    %c0_5 = arith.constant 0 : index
    %c0_6 = arith.constant 0 : index
    %7 = vector.load %arg4[%c0_5, %c0_6] : memref<128x16xf32, #tpu.memory_space<vmem>>, vector<128x16xf32>
    tpu.vector_store %arg4[%c0_5, %c0_6], %6 {strides = array<i32>} : memref<128x16xf32, #tpu.memory_space<vmem>>, vector<128x16xf32>,
    return
  }
  func.func @transform_0(%arg0: i32) -> (i32, i32) {
    %c0_i32 = arith.constant 0 : i32
    %c0_i32_0 = arith.constant 0 : i32
    return %arg0, %c0_i32 : i32, i32
  }
  func.func @transform_1(%arg0: i32) -> (i32, i32) {
    %c0_i32 = arith.constant 0 : i32
    %c0_i32_0 = arith.constant 0 : i32
    %c0_i32_1 = arith.constant 0 : i32
    return %c0_i32, %c0_i32_0 : i32, i32
  }
  func.func @transform_2(%arg0: i32) -> (i32, i32) {
    %c0_i32 = arith.constant 0 : i32
    %c0_i32_0 = arith.constant 0 : i32
    %c0_i32_1 = arith.constant 0 : i32
    return %c0_i32, %c0_i32_0 : i32, i32
  }
  func.func @transform_3(%arg0: i32) -> (i32, i32) {
    %c0_i32 = arith.constant 0 : i32
    %c0_i32_0 = arith.constant 0 : i32
    return %arg0, %c0_i32 : i32, i32
  }
}

</mosaic_0001>

<llo_original>
// kernel: _pallas_forward.1
$region0: #{_pallas_forward.1}
  #allocation0 [shape = 'u32[]', space=smem, size = 0x4, offset = 0x4, fixed_abs, tag = 'smem constant byte address 0x4 - core index']
  #allocation1 [shape = 'u32[144,128]{1,0:T(1,128)}', space=vmem, size = 0x12000, scoped, tag = 'internal scratch']
  %s0 = inlined_call_operand.vmem [shape: f32[250,32], index: 0, kind: input, shape index: {}]
  %s1 = inlined_call_operand.vmem [shape: f32[32,128], index: 1, kind: input, shape index: {}]
  %s2 = inlined_call_operand.vmem [shape: f32[1,16], index: 2, kind: input, shape index: {}]
  %s3 = inlined_call_operand.vmem [shape: f32[250,16], index: 3, kind: output, shape index: {}]
  %s4 = sld [smem:[#allocation0]]
  $region45: #{_pallas_forward.1} parent=0
    _
  %s6 = ssub.s32 1, %s4
  %s7 = scalar_select 0, %s6, %s4
  loop: start=0, step=1, limit=4
  $region2: #{_pallas_forward.1} parent=0 // loop_pre_header
    _
  $region3: #{_pallas_forward.1} parent=0 // loop_header
    %s9 = sphi 0, %s13
    %p10 = scmp.ge.s32.totalorder %s9, 4
    %s19 = sphi 0, %s21
    %s22 = sphi 0, %s19
    %s23 = sphi 0, %s22
    %s39 = sphi 0, %s23
    %s43 = sphi 0, %s43
    %s45 = sphi 0, %s43
    %s46 = sphi 0, %s45
    %s60 = sphi 0, %s46
    %s64 = sphi 0, %s64
    %s66 = sphi 0, %s64
    %s67 = sphi 0, %s66
    %s81 = sphi 0, %s67
    %s87 = sphi 0, %s89
    %s90 = sphi 0, %s87
    %s91 = sphi 0, %s90
    %s107 = sphi 0, %s91
  $region4: #{_pallas_forward.1} parent=0 // loop_header_branch
    %12 = sbr.rel (%p10) target = $region8
  $region5: #{_pallas_forward.1} parent=0 // loop_body
    %s14 = ssub.s32 %s9, 1
    %s15 = ssub.s32 %s9, 2
    %s16 = sadd.s32 %s9, 1
    %s17 = ssub.s32 %s9, %s16
    %p18 = scmp.eq.s32.totalorder %s17, 0
    %s20 = sadd.s32 %s19, 1
    %s21 = scalar_select %p18, %s19, %s20
    %p24 = pneg %p18
    %p25 = scmp.eq.s32.totalorder %s9, 1
    %p26 = por %p24, %p25
    %p27 = scmp.ne.s32.totalorder %s19, %s22
    %p28 = scmp.eq.s32.totalorder %s9, 0
    %p29 = por %p27, %p28
    %p30 = scmp.ne.s32.totalorder %s19, %s22
    %p31 = scmp.eq.s32.totalorder %s14, 1
    %p32 = por %p30, %p31
    %p33 = scmp.ne.s32.totalorder %s22, %s23
    %p34 = scmp.eq.s32.totalorder %s14, 0
    %p35 = por %p33, %p34
    %p36 = scmp.ne.s32.totalorder %s22, %s23
    %p37 = scmp.eq.s32.totalorder %s15, 1
    %p38 = por %p36, %p37
    %p40 = scmp.ne.s32.totalorder %s23, %s39
    %p41 = scmp.eq.s32.totalorder %s15, 0
    %p42 = por %p40, %p41
    %s44 = sadd.s32 %s43, 1
    %p47 = scmp.eq.s32.totalorder %s9, 1
    %p48 = scmp.ne.s32.totalorder %s43, %s45
    %p49 = scmp.eq.s32.totalorder %s9, 0
    %p50 = por %p48, %p49
    %p51 = scmp.ne.s32.totalorder %s43, %s45
    %p52 = scmp.eq.s32.totalorder %s14, 1
    %p53 = por %p51, %p52
    %p54 = scmp.ne.s32.totalorder %s45, %s46
    %p55 = scmp.eq.s32.totalorder %s14, 0
    %p56 = por %p54, %p55
    %p57 = scmp.ne.s32.totalorder %s45, %s46
    %p58 = scmp.eq.s32.totalorder %s15, 1
    %p59 = por %p57, %p58
    %p61 = scmp.ne.s32.totalorder %s46, %s60
    %p62 = scmp.eq.s32.totalorder %s15, 0
    %p63 = por %p61, %p62
    %s65 = sadd.s32 %s64, 1
    %p68 = scmp.eq.s32.totalorder %s9, 1
    %p69 = scmp.ne.s32.totalorder %s64, %s66
    %p70 = scmp.eq.s32.totalorder %s9, 0
    %p71 = por %p69, %p70
    %p72 = scmp.ne.s32.totalorder %s64, %s66
    %p73 = scmp.eq.s32.totalorder %s14, 1
    %p74 = por %p72, %p73
    %p75 = scmp.ne.s32.totalorder %s66, %s67
    %p76 = scmp.eq.s32.totalorder %s14, 0
    %p77 = por %p75, %p76
    %p78 = scmp.ne.s32.totalorder %s66, %s67
    %p79 = scmp.eq.s32.totalorder %s15, 1
    %p80 = por %p78, %p79
    %p82 = scmp.ne.s32.totalorder %s67, %s81
    %p83 = scmp.eq.s32.totalorder %s15, 0
    %p84 = por %p82, %p83
    %s85 = ssub.s32 %s9, %s16
    %p86 = scmp.eq.s32.totalorder %s85, 0
    %s88 = sadd.s32 %s87, 1
    %s89 = scalar_select %p86, %s87, %s88
    %p92 = pneg %p86
    %p93 = scmp.eq.s32.totalorder %s9, 1
    %p94 = por %p92, %p93
    %p95 = scmp.ne.s32.totalorder %s87, %s90
    %p96 = scmp.eq.s32.totalorder %s9, 0
    %p97 = por %p95, %p96
    %p98 = scmp.ne.s32.totalorder %s87, %s90
    %p99 = scmp.eq.s32.totalorder %s14, 1
    %p100 = por %p98, %p99
    %p101 = scmp.ne.s32.totalorder %s90, %s91
    %p102 = scmp.eq.s32.totalorder %s14, 0
    %p103 = por %p101, %p102
    %p104 = scmp.ne.s32.totalorder %s90, %s91
    %p105 = scmp.eq.s32.totalorder %s15, 1
    %p106 = por %p104, %p105
    %p108 = scmp.ne.s32.totalorder %s91, %s107
    %p109 = scmp.eq.s32.totalorder %s15, 0
    %p110 = por %p108, %p109
    %p111 = scmp.le.s32.totalorder 1, %s9
    %p112 = scmp.lt.s32.totalorder %s9, 3
    %p113 = pnand %p111, %p112
    %p114 = pneg %p113
    // Predicated region
    $region9: #{_pallas_forward.1} parent=5 // pred_check
      _
    $region10: #{_pallas_forward.1} parent=5 // pred_check_branch
      %116 = sbr.rel (%p113) target = $region12
    $region11: #{_pallas_forward.1} parent=5 // pred_region
      %s117 = ssub.s32 %s9, 1
      // Predicated region
      $region13: #{_pallas_forward.1} parent=11 // pred_check
        %p118 = pneg %p56
      $region14: #{_pallas_forward.1} parent=11 // pred_check_branch
        %120 = sbr.rel (%p118) target = $region16
      $region15: #{_pallas_forward.1} parent=11 // pred_region
        _
      $region16: #{_pallas_forward.1} parent=11 // pred_fallthru
        _
      // Predicated region
      $region17: #{_pallas_forward.1} parent=11 // pred_check
        %p121 = pneg %p77
      $region18: #{_pallas_forward.1} parent=11 // pred_check_branch
        %123 = sbr.rel (%p121) target = $region20
      $region19: #{_pallas_forward.1} parent=11 // pred_region
        _
      $region20: #{_pallas_forward.1} parent=11 // pred_fallthru
        _
    $region12: #{_pallas_forward.1} parent=5 // pred_fallthru
      _
    %p124 = scmp.lt.s32.totalorder %s9, 2
    // Predicated region
    $region21: #{_pallas_forward.1} parent=5 // pred_check
      %p125 = pneg %p124
    $region22: #{_pallas_forward.1} parent=5 // pred_check_branch
      %127 = sbr.rel (%p125) target = $region24
    $region23: #{_pallas_forward.1} parent=5 // pred_region
      // Predicated region
      $region25: #{_pallas_forward.1} parent=23 // pred_check
        %p128 = pneg %p29
      $region26: #{_pallas_forward.1} parent=23 // pred_check_branch
        %130 = sbr.rel (%p128) target = $region28
      $region27: #{_pallas_forward.1} parent=23 // pred_region
        %s131 = smul.u32 16, %s9
        %p132 = scmp.lt.s32.totalorder %s131, 31
        %s133 = scalar_select %p132, %s131, 31
        %s134 = smul.addr %s133, 8
        %s135 = scalar_lea.vmem %s0, %s134
        %s136 = smul.u32 16, %s9
      $region28: #{_pallas_forward.1} parent=23 // pred_fallthru
        _
    $region24: #{_pallas_forward.1} parent=5 // pred_fallthru
      _
    %p137 = scmp.le.s32.totalorder 1, %s9
    %p138 = scmp.lt.s32.totalorder %s9, 3
    %p139 = pnand %p137, %p138
    %p140 = pneg %p139
    // Predicated region
    $region29: #{_pallas_forward.1} parent=5 // pred_check
      _
    $region30: #{_pallas_forward.1} parent=5 // pred_check_branch
      %142 = sbr.rel (%p139) target = $region32
    $region31: #{_pallas_forward.1} parent=5 // pred_region
      %s143 = ssub.s32 %s9, 1
      %s144 = smul.u32 16, %s14
      %p145 = scmp.lt.s32.totalorder %s144, 31
      %s146 = scalar_select %p145, %s144, 31
      %s147 = smul.addr %s146, 8
      %s148 = scalar_lea.vmem %s0, %s147
      %p149 = pneg %p35
      %p150 = pneg %p32
      %p151 = pneg %p56
      %p152 = pneg %p53
      %p153 = pneg %p77
      %p154 = pneg %p74
      %p155 = pneg %p103
      %p156 = pneg %p100
      %s157 = smul.u32 16, %s14
      %p158 = scmp.lt.s32.totalorder %s157, 31
      %s159 = scalar_select %p158, %s157, 31
      %s160 = smul.addr %s159, 8
      %s161 = scalar_lea.vmem %s3, %s160
      %s162 = smul.u32 16, %s14
      %p163 = scmp.lt.s32.totalorder %s162, 31
      %s164 = scalar_select %p163, %s162, 31
      %s165 = smul.addr %s164, 8
      %s166 = scalar_lea.vmem %s0, %s165
      %s167 = smul.u32 16, %s14
      %s168 = smul.u32 16, %s14
      %p169 = scmp.lt.s32.totalorder %s168, 31
      %s170 = scalar_select %p169, %s168, 31
      %s171 = smul.addr %s170, 8
      %s172 = scalar_lea.vmem %s3, %s171
      %s173 = smul.u32 16, %s14
      %v174 = vld [vmem:[%s166] sm:$0xff]
      %v175 = vld [vmem:[%s166 + $0x8] sm:$0xff]
      %v176 = vld [vmem:[%s166 + $0x10] sm:$0xff]
      %v177 = vld [vmem:[%s166 + $0x18] sm:$0xff]
      %v178 = vld [vmem:[%s166 + $0x20] sm:$0xff]
      %v179 = vld [vmem:[%s166 + $0x28] sm:$0xff]
      %v180 = vld [vmem:[%s166 + $0x30] sm:$0xff]
      %v181 = vld [vmem:[%s166 + $0x38] sm:$0xff]
      %v182 = vld [vmem:[%s166 + $0x40] sm:$0xff]
      %v183 = vld [vmem:[%s166 + $0x48] sm:$0xff]
      %v184 = vld [vmem:[%s166 + $0x50] sm:$0xff]
      %v185 = vld [vmem:[%s166 + $0x58] sm:$0xff]
      %v186 = vld [vmem:[%s166 + $0x60] sm:$0xff]
      %v187 = vld [vmem:[%s166 + $0x68] sm:$0xff]
      %v188 = vld [vmem:[%s166 + $0x70] sm:$0xff]
      %v189 = vld [vmem:[%s166 + $0x78] sm:$0xff]
      %v190 = vld [vmem:[%s1] sm:$0xff]
      %v191 = vld [vmem:[%s1 + $0x8] sm:$0xff]
      %v192 = vld [vmem:[%s1 + $0x10] sm:$0xff]
      %v193 = vld [vmem:[%s1 + $0x18] sm:$0xff]
      %vm194 = vcmask 261120
      %v196 = vsel %vm194, %v174, 0
      %v199 = vsel %vm194, %v175, 0
      %v202 = vsel %vm194, %v176, 0
      %v205 = vsel %vm194, %v177, 0
      %v208 = vsel %vm194, %v178, 0
      %v211 = vsel %vm194, %v179, 0
      %v214 = vsel %vm194, %v180, 0
      %v217 = vsel %vm194, %v181, 0
      %v220 = vsel %vm194, %v182, 0
      %v223 = vsel %vm194, %v183, 0
      %v226 = vsel %vm194, %v184, 0
      %v229 = vsel %vm194, %v185, 0
      %v232 = vsel %vm194, %v186, 0
      %v235 = vsel %vm194, %v187, 0
      %v238 = vsel %vm194, %v188, 0
      %v241 = vsel %vm194, %v189, 0
      %243 = vmatprep.subr.mxu0 0.0
      %244 = vmatpush1.msra.mxu0 %v190
      %245 = vmatprep.subr.mxu0 0.0
      %246 = vmatpush1.msra.mxu0 %v191
      %247 = vmatprep.subr.mxu0 0.0
      %248 = vmatpush1.msra.mxu0 %v192
      %249 = vmatprep.subr.mxu0 0.0
      %250 = vmatpush1.msra.mxu0 %v193
      %251 = vmatprep.subr.mxu0 0.0
      %252 = vmatpush1.msra.mxu0 0.0
      %253 = vmatprep.subr.mxu0 0.0
      %254 = vmatpush1.msra.mxu0 0.0
      %255 = vmatprep.subr.mxu0 0.0
      %256 = vmatpush1.msra.mxu0 0.0
      %257 = vmatprep.subr.mxu0 0.0
      %258 = vmatpush1.msra.mxu0 0.0
      %259 = vmatprep.subr.mxu0 0.0
      %260 = vmatpush1.msra.mxu0 0.0
      %261 = vmatprep.subr.mxu0 0.0
      %262 = vmatpush1.msra.mxu0 0.0
      %263 = vmatprep.subr.mxu0 0.0
      %264 = vmatpush1.msra.mxu0 0.0
      %265 = vmatprep.subr.mxu0 0.0
      %266 = vmatpush1.msra.mxu0 0.0
      %267 = vmatprep.subr.mxu0 0.0
      %268 = vmatpush1.msra.mxu0 0.0
      %269 = vmatprep.subr.mxu0 0.0
      %270 = vmatpush1.msra.mxu0 0.0
      %271 = vmatprep.subr.mxu0 0.0
      %272 = vmatpush1.msra.mxu0 0.0
      %273 = vmatprep.subr.mxu0 0.0
      %274 = vmatpush1.msra.mxu0 0.0
      %275 = vmatprep.subr.mxu0 0.0
      %276 = vmatpush1.msra.mxu0 0.0
      %277 = vmatprep.subr.mxu0 0.0
      %278 = vmatpush1.msra.mxu0 0.0
      %279 = vmatprep.subr.mxu0 0.0
      %280 = vmatpush1.msra.mxu0 0.0
      %281 = vmatprep.subr.mxu0 0.0
      %282 = vmatpush1.msra.mxu0 0.0
      %283 = vmatprep.subr.mxu0 0.0
      %284 = vmatpush1.msra.mxu0 0.0
      %285 = vmatprep.subr.mxu0 0.0
      %286 = vmatpush1.msra.mxu0 0.0
      %287 = vmatprep.subr.mxu0 0.0
      %288 = vmatpush1.msra.mxu0 0.0
      %289 = vmatprep.subr.mxu0 0.0
      %290 = vmatpush1.msra.mxu0 0.0
      %291 = vmatprep.subr.mxu0 0.0
      %292 = vmatpush1.msra.mxu0 0.0
      %293 = vmatprep.subr.mxu0 0.0
      %294 = vmatpush1.msra.mxu0 0.0
      %295 = vmatprep.subr.mxu0 0.0
      %296 = vmatpush1.msra.mxu0 0.0
      %297 = vmatprep.subr.mxu0 0.0
      %298 = vmatpush1.msra.mxu0 0.0
      %299 = vmatprep.subr.mxu0 0.0
      %300 = vmatpush1.msra.mxu0 0.0
      %301 = vmatprep.subr.mxu0 0.0
      %302 = vmatpush1.msra.mxu0 0.0
      %303 = vmatprep.subr.mxu0 0.0
      %304 = vmatpush1.msra.mxu0 0.0
      %305 = vmatprep.subr.mxu0 0.0
      %306 = vmatpush1.msra.mxu0 0.0
      %307 = vmatprep.mubr.f32.mxu0 0.0
      %308 = vmatmul.mubr.f32.gmra.mrb[0].mxu0 %v196
      %v309 = vpop.f32.mrb[0].mxu0
      %v310 = vadd.f32 0.0, %v309
      %v311 = vpop.f32.mrb[0].mxu0
      %312 = vmatprep.mubr.f32.mxu0 0.0
      %313 = vmatmul.mubr.f32.gmra.mrb[0].mxu0 %v199
      %v314 = vpop.f32.mrb[0].mxu0
      %v315 = vadd.f32 0.0, %v314
      %v316 = vpop.f32.mrb[0].mxu0
      %317 = vmatprep.mubr.f32.mxu0 0.0
      %318 = vmatmul.mubr.f32.gmra.mrb[0].mxu0 %v202
      %v319 = vpop.f32.mrb[0].mxu0
      %v320 = vadd.f32 0.0, %v319
      %v321 = vpop.f32.mrb[0].mxu0
      %322 = vmatprep.mubr.f32.mxu0 0.0
      %323 = vmatmul.mubr.f32.gmra.mrb[0].mxu0 %v205
      %v324 = vpop.f32.mrb[0].mxu0
      %v325 = vadd.f32 0.0, %v324
      %v326 = vpop.f32.mrb[0].mxu0
      %327 = vmatprep.mubr.f32.mxu0 0.0
      %328 = vmatmul.mubr.f32.gmra.mrb[0].mxu0 %v208
      %v329 = vpop.f32.mrb[0].mxu0
      %v330 = vadd.f32 0.0, %v329
      %v331 = vpop.f32.mrb[0].mxu0
      %332 = vmatprep.mubr.f32.mxu0 0.0
      %333 = vmatmul.mubr.f32.gmra.mrb[0].mxu0 %v211
      %v334 = vpop.f32.mrb[0].mxu0
      %v335 = vadd.f32 0.0, %v334
      %v336 = vpop.f32.mrb[0].mxu0
      %337 = vmatprep.mubr.f32.mxu0 0.0
      %338 = vmatmul.mubr.f32.gmra.mrb[0].mxu0 %v214
      %v339 = vpop.f32.mrb[0].mxu0
      %v340 = vadd.f32 0.0, %v339
      %v341 = vpop.f32.mrb[0].mxu0
      %342 = vmatprep.mubr.f32.mxu0 0.0
      %343 = vmatmul.mubr.f32.gmra.mrb[0].mxu0 %v217
      %v344 = vpop.f32.mrb[0].mxu0
      %v345 = vadd.f32 0.0, %v344
      %v346 = vpop.f32.mrb[0].mxu0
      %347 = vmatprep.mubr.f32.mxu0 0.0
      %348 = vmatmul.mubr.f32.gmra.mrb[0].mxu0 %v220
      %v349 = vpop.f32.mrb[0].mxu0
      %v350 = vadd.f32 0.0, %v349
      %v351 = vpop.f32.mrb[0].mxu0
      %352 = vmatprep.mubr.f32.mxu0 0.0
      %353 = vmatmul.mubr.f32.gmra.mrb[0].mxu0 %v223
      %v354 = vpop.f32.mrb[0].mxu0
      %v355 = vadd.f32 0.0, %v354
      %v356 = vpop.f32.mrb[0].mxu0
      %357 = vmatprep.mubr.f32.mxu0 0.0
      %358 = vmatmul.mubr.f32.gmra.mrb[0].mxu0 %v226
      %v359 = vpop.f32.mrb[0].mxu0
      %v360 = vadd.f32 0.0, %v359
      %v361 = vpop.f32.mrb[0].mxu0
      %362 = vmatprep.mubr.f32.mxu0 0.0
      %363 = vmatmul.mubr.f32.gmra.mrb[0].mxu0 %v229
      %v364 = vpop.f32.mrb[0].mxu0
      %v365 = vadd.f32 0.0, %v364
      %v366 = vpop.f32.mrb[0].mxu0
      %367 = vmatprep.mubr.f32.mxu0 0.0
      %368 = vmatmul.mubr.f32.gmra.mrb[0].mxu0 %v232
      %v369 = vpop.f32.mrb[0].mxu0
      %v370 = vadd.f32 0.0, %v369
      %v371 = vpop.f32.mrb[0].mxu0
      %372 = vmatprep.mubr.f32.mxu0 0.0
      %373 = vmatmul.mubr.f32.gmra.mrb[0].mxu0 %v235
      %v374 = vpop.f32.mrb[0].mxu0
      %v375 = vadd.f32 0.0, %v374
      %v376 = vpop.f32.mrb[0].mxu0
      %377 = vmatprep.mubr.f32.mxu0 0.0
      %378 = vmatmul.mubr.f32.gmra.mrb[0].mxu0 %v238
      %v379 = vpop.f32.mrb[0].mxu0
      %v380 = vadd.f32 0.0, %v379
      %v381 = vpop.f32.mrb[0].mxu0
      %382 = vmatprep.mubr.f32.mxu0 0.0
      %383 = vmatmul.mubr.f32.gmra.mrb[0].mxu0 %v241
      %v384 = vpop.f32.mrb[0].mxu0
      %v385 = vadd.f32 0.0, %v384
      %v386 = vpop.f32.mrb[0].mxu0
      %387 = vdwg.mxu0
      %v388 = vld [vmem:[%s2] sm:$0x1]
      %v390 = vlaneseq
      %v391 = vshrl.u32 %v390, 7
      %v392 = vsub.s32 0, %v391
      %v393 = vrot.slane %v388, %v392
      %v395 = vadd.f32 %v310, %v393
      %v396 = vadd.f32 %v315, %v393
      %v397 = vadd.f32 %v320, %v393
      %v398 = vadd.f32 %v325, %v393
      %v399 = vadd.f32 %v330, %v393
      %v400 = vadd.f32 %v335, %v393
      %v401 = vadd.f32 %v340, %v393
      %v402 = vadd.f32 %v345, %v393
      %v403 = vadd.f32 %v350, %v393
      %v404 = vadd.f32 %v355, %v393
      %v405 = vadd.f32 %v360, %v393
      %v406 = vadd.f32 %v365, %v393
      %v407 = vadd.f32 %v370, %v393
      %v408 = vadd.f32 %v375, %v393
      %v409 = vadd.f32 %v380, %v393
      %v410 = vadd.f32 %v385, %v393
      %vm411 = vcmask 130048
      %412 = vst.msk [vmem:[%s172] sm:$0xff] %vm411, %v395
      %413 = vst.msk [vmem:[%s172 + $0x8] sm:$0xff] %vm411, %v396
      %414 = vst.msk [vmem:[%s172 + $0x10] sm:$0xff] %vm411, %v397
      %415 = vst.msk [vmem:[%s172 + $0x18] sm:$0xff] %vm411, %v398
      %416 = vst.msk [vmem:[%s172 + $0x20] sm:$0xff] %vm411, %v399
      %417 = vst.msk [vmem:[%s172 + $0x28] sm:$0xff] %vm411, %v400
      %418 = vst.msk [vmem:[%s172 + $0x30] sm:$0xff] %vm411, %v401
      %419 = vst.msk [vmem:[%s172 + $0x38] sm:$0xff] %vm411, %v402
      %420 = vst.msk [vmem:[%s172 + $0x40] sm:$0xff] %vm411, %v403
      %421 = vst.msk [vmem:[%s172 + $0x48] sm:$0xff] %vm411, %v404
      %422 = vst.msk [vmem:[%s172 + $0x50] sm:$0xff] %vm411, %v405
      %423 = vst.msk [vmem:[%s172 + $0x58] sm:$0xff] %vm411, %v406
      %424 = vst.msk [vmem:[%s172 + $0x60] sm:$0xff] %vm411, %v407
      %425 = vst.msk [vmem:[%s172 + $0x68] sm:$0xff] %vm411, %v408
      %426 = vst.msk [vmem:[%s172 + $0x70] sm:$0xff] %vm411, %v409
      %427 = vst.msk [vmem:[%s172 + $0x78] sm:$0xff] %vm411, %v410
      %s428 = smul.u32 16, %s14
      %p429 = scmp.lt.s32.totalorder %s428, 31
      %s430 = scalar_select %p429, %s428, 31
      %s431 = smul.addr %s430, 8
      %s432 = scalar_lea.vmem %s3, %s431
      // Predicated region
      $region33: #{_pallas_forward.1} parent=31 // pred_check
        %p433 = pneg %p100
      $region34: #{_pallas_forward.1} parent=31 // pred_check_branch
        %435 = sbr.rel (%p433) target = $region36
      $region35: #{_pallas_forward.1} parent=31 // pred_region
        %s436 = smul.u32 16, %s14
      $region36: #{_pallas_forward.1} parent=31 // pred_fallthru
        _
    $region32: #{_pallas_forward.1} parent=5 // pred_fallthru
      _
    %p437 = scmp.le.s32.totalorder 2, %s9
    // Predicated region
    $region37: #{_pallas_forward.1} parent=5 // pred_check
      %p438 = pneg %p437
    $region38: #{_pallas_forward.1} parent=5 // pred_check_branch
      %440 = sbr.rel (%p438) target = $region40
    $region39: #{_pallas_forward.1} parent=5 // pred_region
      %s441 = ssub.s32 %s9, 2
      // Predicated region
      $region41: #{_pallas_forward.1} parent=39 // pred_check
        %p442 = pneg %p106
      $region42: #{_pallas_forward.1} parent=39 // pred_check_branch
        %444 = sbr.rel (%p442) target = $region44
      $region43: #{_pallas_forward.1} parent=39 // pred_region
        %s445 = smul.u32 16, %s15
        %p446 = scmp.lt.s32.totalorder %s445, 31
        %s447 = scalar_select %p446, %s445, 31
        %s448 = smul.addr %s447, 8
        %s449 = scalar_lea.vmem %s3, %s448
      $region44: #{_pallas_forward.1} parent=39 // pred_fallthru
        _
    $region40: #{_pallas_forward.1} parent=5 // pred_fallthru
      _
  $region6: #{_pallas_forward.1} parent=0 // loop_footer
    %s13 = sadd.s32 1, %s9
  $region7: #{_pallas_forward.1} parent=0 // loop_footer_branch
    %8 = sbr.rel target = $region3
  $region8: #{_pallas_forward.1} parent=0 // loop_exit
    _

</llo_original>
